<compile_context>
chip_gen: v7x
topology: tpu7x:2x2x1
jax: 0.10.0
libtpu: 0.0.40
codegen_flags: <defaults>
</compile_context>

<pallas_src>
import jax
import jax.numpy as jnp
from jax.experimental import pallas as pl
from jax.experimental.pallas import tpu as pltpu


def _cdiv(a, b):
    return -(-a // b)


def _round_up(x, m):
    return ((x + m - 1) // m) * m


def generator_kernel(x_ref, w1_ref, b1_ref, w2_ref, b2_ref, wo_ref, bo_ref,
                     out_ref):
    # Layer 1: tanh(x_cat @ W1 + b1).  x_cat was concatenated / folded in the
    # wrapper, so this is a single dense MXU matmul with f32 accumulation.
    h = jnp.dot(x_ref[...], w1_ref[...], preferred_element_type=jnp.float32)
    h = jnp.tanh(h + b1_ref[...])

    # Layer 2: tanh(h @ W2 + b2) -- bf16 operands, f32 accumulate, EUP tanh.
    h = jnp.dot(h.astype(w2_ref.dtype), w2_ref[...],
                preferred_element_type=jnp.float32)
    h = jnp.tanh(h + b2_ref[...])

    # Output layer (SingleOutput): sigmoid(h @ Wo + bo).
    o = jnp.dot(h.astype(wo_ref.dtype), wo_ref[...],
                preferred_element_type=jnp.float32)
    out_ref[...] = jax.nn.sigmoid(o + bo_ref[...]).astype(out_ref.dtype)


def _block_diag(w, fold):
    """kron(I_fold, w): (in, out) -> (fold*in, fold*out); exact (0/1 factors)."""
    eye = jnp.eye(fold, dtype=jnp.float32)
    return jnp.kron(eye, w.astype(jnp.float32)).astype(w.dtype)


def generator_forward(inputs, mask, params, *, block_b=8192,
                      out_dtype=jnp.float32):
    """inputs, mask: [B, S] float32. params: dict of weights (see init_params)."""
    B, S = inputs.shape
    H1 = params["w1"].shape[1]
    H2 = params["w2"].shape[1]
    wdt = params["w1"].dtype  # bf16 matmul-operand dtype

    # ---- Lane-density fold --------------------------------------------------
    # At GAIN-like sizes (2S, H1, H2 << 128 lanes) each activation row uses a
    # small fraction of a vreg and each output store is a masked partial vst.
    # Folding 8 batch rows into the lane axis (with block-diagonal weights)
    # makes all matmul widths and the output last dim multiples of 128 lanes.
    fold = 8 if max(2 * S, H1, H2, S) <= 128 else 1

    # ---- Batch tiling --------------------------------------------------------
    # Equal-sized tiles with n = cdiv(B, block_b) grid steps: padding is at
    # most ~8*fold rows per step (vs up to block_b-1 rows when rounding B up
    # to a multiple of the tile).  Force >=2 steps for moderately large B so
    # the "parallel" batch axis can shard across both v7x TensorCores.
    Bf = _cdiv(B, fold)                      # folded rows needed
    n = max(1, _cdiv(B, block_b))            # grid steps
    if n == 1 and Bf >= 64:
        n = 2
    if n == 1:
        TBf = Bf                             # full-extent block, no padding
    else:
        TBf = _round_up(_cdiv(Bf, n), 8)     # sublane-aligned equal tiles
    Bf_pad = n * TBf
    B_pad = Bf_pad * fold

    # ---- Build the (folded) input slab once in the wrapper -------------------
    x_cat = jnp.concatenate([inputs.astype(wdt), mask.astype(wdt)], axis=1)
    if B_pad != B:
        x_cat = jnp.pad(x_cat, ((0, B_pad - B), (0, 0)))
    x_slab = x_cat.reshape(Bf_pad, fold * 2 * S)

    # ---- Fold the (tiny) weights / biases ------------------------------------
    if fold == 1:
        w1, b1 = params["w1"], params["b1"]
        w2, b2 = params["w2"], params["b2"]
        wo, bo = params["wo"], params["bo"]
    else:
        w1 = _block_diag(params["w1"], fold)
        w2 = _block_diag(params["w2"], fold)
        wo = _block_diag(params["wo"], fold)
        b1 = jnp.tile(params["b1"], (1, fold))
        b2 = jnp.tile(params["b2"], (1, fold))
        bo = jnp.tile(params["bo"], (1, fold))

    Din, Dh1, Dh2, Dout = fold * 2 * S, fold * H1, fold * H2, fold * S

    in_spec = pl.BlockSpec((TBf, Din), lambda i: (i, 0))
    out_spec = pl.BlockSpec((TBf, Dout), lambda i: (i, 0))

    def resident(shape):
        # Constant block index -> stays VMEM-resident across all grid steps.
        return pl.BlockSpec(shape, lambda i: (0, 0))

    out = pl.pallas_call(
        generator_kernel,
        out_shape=jax.ShapeDtypeStruct((Bf_pad, Dout), out_dtype),
        grid=(n,),
        in_specs=[
            in_spec,
            resident((Din, Dh1)), resident((1, Dh1)),
            resident((Dh1, Dh2)), resident((1, Dh2)),
            resident((Dh2, Dout)), resident((1, Dout)),
        ],
        out_specs=out_spec,
        compiler_params=pltpu.CompilerParams(
            dimension_semantics=("parallel",),
            vmem_limit_bytes=32 * 1024 * 1024,
        ),
    )(x_slab, w1, b1, w2, b2, wo, bo)

    # Unfold: (Bf_pad, fold*S) and (B_pad, S) are byte-identical row-major.
    return out.reshape(B_pad, S)[:B]


def init_params(key, size, hidden_sizes, *, weight_dtype=jnp.bfloat16):
    """Deterministic synthetic parameters (same shapes as the nn.Linear layers).

    Weights are stored transposed ([in, out]) in bf16 for the MXU; biases stay
    f32 (added after the f32-accumulated matmul).
    """
    S = size
    H1, H2 = hidden_sizes
    ks = jax.random.split(key, 6)
    scale = 0.1
    return {
        "w1": (scale * jax.random.normal(ks[0], (2 * S, H1), jnp.float32)
               ).astype(weight_dtype),
        "b1": scale * jax.random.normal(ks[1], (1, H1), jnp.float32),
        "w2": (scale * jax.random.normal(ks[2], (H1, H2), jnp.float32)
               ).astype(weight_dtype),
        "b2": scale * jax.random.normal(ks[3], (1, H2), jnp.float32),
        "wo": (scale * jax.random.normal(ks[4], (H2, S), jnp.float32)
               ).astype(weight_dtype),
        "bo": scale * jax.random.normal(ks[5], (1, S), jnp.float32),
    }


def reference_forward(inputs, mask, params):
    """f32 reference using the same (bf16-stored) weights, upcast to f32."""
    f32 = lambda a: a.astype(jnp.float32)
    wdt = params["w1"].dtype
    x = jnp.concatenate(
        [f32(inputs.astype(wdt)), f32(mask.astype(wdt))], axis=1)
    h = jnp.tanh(x @ f32(params["w1"]) + params["b1"])
    h = jnp.tanh(h @ f32(params["w2"]) + params["b2"])
    return jax.nn.sigmoid(h @ f32(params["wo"]) + params["bo"])


if __name__ == "__main__":
    B, S = 8, 16
    hidden_sizes = [32, 32]

    key = jax.random.PRNGKey(0)
    k_in, k_mask, k_par = jax.random.split(key, 3)

    inputs = jax.random.uniform(k_in, (B, S), jnp.float32)
    mask = (jax.random.uniform(k_mask, (B, S)) > 0.5).astype(jnp.float32)
    params = init_params(k_par, S, hidden_sizes)

    out = generator_forward(inputs, mask, params)
    out = jax.block_until_ready(out)

    ref = reference_forward(inputs, mask, params)
    assert out.shape == (B, S)
    # Tolerance relaxed for bf16 matmul operands (f32 accumulation).
    assert jnp.allclose(out, ref, atol=1e-2, rtol=1e-2), float(
        jnp.max(jnp.abs(out - ref)))

    print("KERNEL_OK")
</pallas_src>

<mosaic_0001>
module attributes {stable_mosaic.version = 11 : i64} {
  func.func @generator_kernel(%arg0: i32, %arg1: memref<1x256xbf16, #tpu.memory_space<vmem>>, %arg2: memref<256x256xbf16, #tpu.memory_space<vmem>>, %arg3: memref<1x256xf32, #tpu.memory_space<vmem>>, %arg4: memref<256x256xbf16, #tpu.memory_space<vmem>>, %arg5: memref<1x256xf32, #tpu.memory_space<vmem>>, %arg6: memref<256x128xbf16, #tpu.memory_space<vmem>>, %arg7: memref<1x128xf32, #tpu.memory_space<vmem>>, %arg8: memref<1x128xf32, #tpu.memory_space<vmem>>) attributes {dimension_semantics = [#tpu.dimension_semantics<parallel>], iteration_bounds = array<i64: 1>, scalar_prefetch = 0 : i64, scratch_operands = 0 : i64, tpu.core_type = #tpu.core_type<tc>, window_params = [{transform_indices = @transform_0, window_bounds = array<i64: 1, 256>}, {pipeline_mode = #tpu.pipeline_mode<synchronous>, transform_indices = @transform_1, window_bounds = array<i64: 256, 256>}, {pipeline_mode = #tpu.pipeline_mode<synchronous>, transform_indices = @transform_2, window_bounds = array<i64: 1, 256>}, {pipeline_mode = #tpu.pipeline_mode<synchronous>, transform_indices = @transform_3, window_bounds = array<i64: 256, 256>}, {pipeline_mode = #tpu.pipeline_mode<synchronous>, transform_indices = @transform_4, window_bounds = array<i64: 1, 256>}, {pipeline_mode = #tpu.pipeline_mode<synchronous>, transform_indices = @transform_5, window_bounds = array<i64: 256, 128>}, {pipeline_mode = #tpu.pipeline_mode<synchronous>, transform_indices = @transform_6, window_bounds = array<i64: 1, 128>}, {transform_indices = @transform_7, window_bounds = array<i64: 1, 128>}]} {
    %c0 = arith.constant 0 : index
    %c0_0 = arith.constant 0 : index
    %0 = vector.load %arg1[%c0, %c0_0] : memref<1x256xbf16, #tpu.memory_space<vmem>>, vector<1x256xbf16>
    %c0_1 = arith.constant 0 : index
    %c0_2 = arith.constant 0 : index
    %1 = vector.load %arg2[%c0_1, %c0_2] : memref<256x256xbf16, #tpu.memory_space<vmem>>, vector<256x256xbf16>
    %cst = arith.constant dense<0.000000e+00> : vector<1x256xf32>
    %2 = tpu.matmul %0, %1, %cst {dimension_numbers = #tpu.dot_dimension_numbers<[1], [0], [0], [1], [0, 0, 1, 1], [], []>} : vector<1x256xbf16>, vector<256x256xbf16>, vector<1x256xf32> -> vector<1x256xf32>
    %c0_3 = arith.constant 0 : index
    %c0_4 = arith.constant 0 : index
    %3 = vector.load %arg3[%c0_3, %c0_4] : memref<1x256xf32, #tpu.memory_space<vmem>>, vector<1x256xf32>
    %4 = arith.addf %2, %3 : vector<1x256xf32>
    %5 = math.tanh %4 : vector<1x256xf32>
    %6 = arith.truncf %5 : vector<1x256xf32> to vector<1x256xbf16>
    %c0_5 = arith.constant 0 : index
    %c0_6 = arith.constant 0 : index
    %7 = vector.load %arg4[%c0_5, %c0_6] : memref<256x256xbf16, #tpu.memory_space<vmem>>, vector<256x256xbf16>
    %cst_7 = arith.constant dense<0.000000e+00> : vector<1x256xf32>
    %8 = tpu.matmul %6, %7, %cst_7 {dimension_numbers = #tpu.dot_dimension_numbers<[1], [0], [0], [1], [0, 0, 1, 1], [], []>} : vector<1x256xbf16>, vector<256x256xbf16>, vector<1x256xf32> -> vector<1x256xf32>
    %c0_8 = arith.constant 0 : index
    %c0_9 = arith.constant 0 : index
    %9 = vector.load %arg5[%c0_8, %c0_9] : memref<1x256xf32, #tpu.memory_space<vmem>>, vector<1x256xf32>
    %10 = arith.addf %8, %9 : vector<1x256xf32>
    %11 = math.tanh %10 : vector<1x256xf32>
    %12 = arith.truncf %11 : vector<1x256xf32> to vector<1x256xbf16>
    %c0_10 = arith.constant 0 : index
    %c0_11 = arith.constant 0 : index
    %13 = vector.load %arg6[%c0_10, %c0_11] : memref<256x128xbf16, #tpu.memory_space<vmem>>, vector<256x128xbf16>
    %cst_12 = arith.constant dense<0.000000e+00> : vector<1x128xf32>
    %14 = tpu.matmul %12, %13, %cst_12 {dimension_numbers = #tpu.dot_dimension_numbers<[1], [0], [0], [1], [0, 0, 1, 1], [], []>} : vector<1x256xbf16>, vector<256x128xbf16>, vector<1x128xf32> -> vector<1x128xf32>
    %c0_13 = arith.constant 0 : index
    %c0_14 = arith.constant 0 : index
    %15 = vector.load %arg7[%c0_13, %c0_14] : memref<1x128xf32, #tpu.memory_space<vmem>>, vector<1x128xf32>
    %16 = arith.addf %14, %15 : vector<1x128xf32>
    %17 = arith.negf %16 : vector<1x128xf32>
    %18 = math.exp %17 : vector<1x128xf32>
    %cst_15 = arith.constant 1.000000e+00 : f32
    %19 = vector.broadcast %cst_15 : f32 to vector<1x128xf32>
    %20 = arith.addf %19, %18 : vector<1x128xf32>
    %21 = arith.divf %19, %20 : vector<1x128xf32>
    %c0_16 = arith.constant 0 : index
    %c0_17 = arith.constant 0 : index
    %22 = vector.load %arg8[%c0_16, %c0_17] : memref<1x128xf32, #tpu.memory_space<vmem>>, vector<1x128xf32>
    tpu.vector_store %arg8[%c0_16, %c0_17], %21 {strides = array<i32>} : memref<1x128xf32, #tpu.memory_space<vmem>>, vector<1x128xf32>,
    return
  }
  func.func @transform_0(%arg0: i32) -> (i32, i32) {
    %c0_i32 = arith.constant 0 : i32
    %c0_i32_0 = arith.constant 0 : i32
    return %arg0, %c0_i32 : i32, i32
  }
  func.func @transform_1(%arg0: i32) -> (i32, i32) {
    %c0_i32 = arith.constant 0 : i32
    %c0_i32_0 = arith.constant 0 : i32
    %c0_i32_1 = arith.constant 0 : i32
    return %c0_i32, %c0_i32_0 : i32, i32
  }
  func.func @transform_2(%arg0: i32) -> (i32, i32) {
    %c0_i32 = arith.constant 0 : i32
    %c0_i32_0 = arith.constant 0 : i32
    %c0_i32_1 = arith.constant 0 : i32
    return %c0_i32, %c0_i32_0 : i32, i32
  }
  func.func @transform_3(%arg0: i32) -> (i32, i32) {
    %c0_i32 = arith.constant 0 : i32
    %c0_i32_0 = arith.constant 0 : i32
    %c0_i32_1 = arith.constant 0 : i32
    return %c0_i32, %c0_i32_0 : i32, i32
  }
  func.func @transform_4(%arg0: i32) -> (i32, i32) {
    %c0_i32 = arith.constant 0 : i32
    %c0_i32_0 = arith.constant 0 : i32
    %c0_i32_1 = arith.constant 0 : i32
    return %c0_i32, %c0_i32_0 : i32, i32
  }
  func.func @transform_5(%arg0: i32) -> (i32, i32) {
    %c0_i32 = arith.constant 0 : i32
    %c0_i32_0 = arith.constant 0 : i32
    %c0_i32_1 = arith.constant 0 : i32
    return %c0_i32, %c0_i32_0 : i32, i32
  }
  func.func @transform_6(%arg0: i32) -> (i32, i32) {
    %c0_i32 = arith.constant 0 : i32
    %c0_i32_0 = arith.constant 0 : i32
    %c0_i32_1 = arith.constant 0 : i32
    return %c0_i32, %c0_i32_0 : i32, i32
  }
  func.func @transform_7(%arg0: i32) -> (i32, i32) {
    %c0_i32 = arith.constant 0 : i32
    %c0_i32_0 = arith.constant 0 : i32
    return %arg0, %c0_i32 : i32, i32
  }
}

</mosaic_0001>

<llo_original>
// kernel: tpu_custom_call.1
$region0: #{tpu_custom_call.1}
  #allocation0 [shape = 'u32[]', space=smem, size = 0x4, offset = 0x4, fixed_abs, tag = 'smem constant byte address 0x4 - core index']
  #allocation1 [shape = 'u32[144,128]{1,0:T(1,128)}', space=vmem, size = 0x12000, scoped, tag = 'internal scratch']
  %s0 = inlined_call_operand.hbm [shape: bf16[1,256], index: 0, kind: input, shape index: {}]
  %s1 = inlined_call_operand.hbm [shape: bf16[256,256], index: 1, kind: input, shape index: {}]
  %s2 = inlined_call_operand.vmem [shape: f32[1,256], index: 2, kind: input, shape index: {}]
  %s3 = inlined_call_operand.hbm [shape: bf16[256,256], index: 3, kind: input, shape index: {}]
  %s4 = inlined_call_operand.vmem [shape: f32[1,256], index: 4, kind: input, shape index: {}]
  %s5 = inlined_call_operand.hbm [shape: bf16[256,128], index: 5, kind: input, shape index: {}]
  %s6 = inlined_call_operand.vmem [shape: f32[1,128], index: 6, kind: input, shape index: {}]
  %s7 = inlined_call_operand.hbm [shape: f32[1,128], index: 7, kind: output, shape index: {}]
  %s8 = sld [smem:[#allocation0]]
  $region54: #{tpu_custom_call.1} parent=0
    _
  %s10 = ssub.s32 1, %s8
  %s11 = scalar_select 0, %s10, %s8
  $region1: #{tpu_custom_call.1} parent=0
    #allocation2 [shape = 'u8[1024]{0}', space=vmem, size = 0x400, scoped, tag = 'input window, operand 0, single buffered']
    #allocation3 [shape = 's32[1]{0}', space=sflag, size = 0x4, scoped, tag = 'scoped memory for tpu_custom_call.1']
    #allocation4 [shape = 's32[1]{0}', space=sflag, size = 0x4, scoped, tag = 'scoped memory for tpu_custom_call.1']
    #allocation5 [shape = 'u8[131072]{0}', space=vmem, size = 0x20000, scoped, tag = 'input window, operand 1, single buffered']
    #allocation6 [shape = 's32[1]{0}', space=sflag, size = 0x4, scoped, tag = 'scoped memory for tpu_custom_call.1']
    #allocation7 [shape = 'u8[131072]{0}', space=vmem, size = 0x20000, scoped, tag = 'input window, operand 3, single buffered']
    #allocation8 [shape = 'u8[65536]{0}', space=vmem, size = 0x10000, scoped, tag = 'input window, operand 5, single buffered']
    #allocation9 [shape = 's32[1]{0}', space=sflag, size = 0x4, scoped, tag = 'scoped memory for tpu_custom_call.1']
    #allocation10 [shape = 'u8[512]{0}', space=vmem, size = 0x400, scoped, tag = 'output window, operand 0, single buffered']
    %12 = vsyncpa [#allocation3], 0
    %13 = vsyncpa [#allocation6], 0
    %14 = vsyncpa [#allocation9], 0
    %15 = vsyncpa [#allocation4], 0
    // Predicated region
    $region2: #{tpu_custom_call.1} parent=1 // pred_check
      _
    $region3: #{tpu_custom_call.1} parent=1 // pred_check_branch
      %17 = sbr.rel (0) target = $region5
    $region4: #{tpu_custom_call.1} parent=1 // pred_region
      %s19 = ssub.s32 32, 32
      %20 = vsyncadd [#allocation3], %s19
      %s22 = sshll.u32 [#allocation2], 4
      %s23 = int_to_ptr.vmem [resolvable:$true] %s22
      %25 = dma.hbm_to_vmem [thread:$0]  %s0, 32, %s23, [#allocation3]
    $region5: #{tpu_custom_call.1} parent=1 // pred_fallthru
      _
    // Predicated region
    $region6: #{tpu_custom_call.1} parent=1 // pred_check
      _
    $region7: #{tpu_custom_call.1} parent=1 // pred_check_branch
      %27 = sbr.rel (0) target = $region9
    $region8: #{tpu_custom_call.1} parent=1 // pred_region
      %s29 = ssub.s32 4096, 4096
      %30 = vsyncadd [#allocation6], %s29
      %s31 = sshll.u32 [#allocation5], 4
      %s32 = int_to_ptr.vmem [resolvable:$true] %s31
      %37 = dma.hbm_to_vmem [thread:$0]  %s1, 4096, %s32, [#allocation6], 128, 128, 8
    $region9: #{tpu_custom_call.1} parent=1 // pred_fallthru
      _
    // Predicated region
    $region10: #{tpu_custom_call.1} parent=1 // pred_check
      _
    $region11: #{tpu_custom_call.1} parent=1 // pred_check_branch
      %39 = sbr.rel (0) target = $region13
    $region12: #{tpu_custom_call.1} parent=1 // pred_region
      _
    $region13: #{tpu_custom_call.1} parent=1 // pred_fallthru
      _
    // Predicated region
    $region14: #{tpu_custom_call.1} parent=1 // pred_check
      _
    $region15: #{tpu_custom_call.1} parent=1 // pred_check_branch
      %41 = sbr.rel (0) target = $region17
    $region16: #{tpu_custom_call.1} parent=1 // pred_region
      %s43 = ssub.s32 4096, 4096
      %44 = vsyncadd [#allocation6], %s43
      %s45 = sshll.u32 [#allocation7], 4
      %s46 = int_to_ptr.vmem [resolvable:$true] %s45
      %51 = dma.hbm_to_vmem [thread:$0]  %s3, 4096, %s46, [#allocation6], 128, 128, 8
    $region17: #{tpu_custom_call.1} parent=1 // pred_fallthru
      _
    // Predicated region
    $region18: #{tpu_custom_call.1} parent=1 // pred_check
      _
    $region19: #{tpu_custom_call.1} parent=1 // pred_check_branch
      %53 = sbr.rel (0) target = $region21
    $region20: #{tpu_custom_call.1} parent=1 // pred_region
      _
    $region21: #{tpu_custom_call.1} parent=1 // pred_fallthru
      _
    // Predicated region
    $region22: #{tpu_custom_call.1} parent=1 // pred_check
      _
    $region23: #{tpu_custom_call.1} parent=1 // pred_check_branch
      %55 = sbr.rel (0) target = $region25
    $region24: #{tpu_custom_call.1} parent=1 // pred_region
      %s57 = ssub.s32 2048, 2048
      %58 = vsyncadd [#allocation9], %s57
      %s59 = sshll.u32 [#allocation8], 4
      %s60 = int_to_ptr.vmem [resolvable:$true] %s59
      %65 = dma.hbm_to_vmem [thread:$0]  %s5, 2048, %s60, [#allocation9], 64, 64, 4
    $region25: #{tpu_custom_call.1} parent=1 // pred_fallthru
      _
    // Predicated region
    $region26: #{tpu_custom_call.1} parent=1 // pred_check
      _
    $region27: #{tpu_custom_call.1} parent=1 // pred_check_branch
      %67 = sbr.rel (0) target = $region29
    $region28: #{tpu_custom_call.1} parent=1 // pred_region
      _
    $region29: #{tpu_custom_call.1} parent=1 // pred_fallthru
      _
    // Predicated region
    $region30: #{tpu_custom_call.1} parent=1 // pred_check
      _
    $region31: #{tpu_custom_call.1} parent=1 // pred_check_branch
      %69 = sbr.rel (0) target = $region33
    $region32: #{tpu_custom_call.1} parent=1 // pred_region
      %70 = dma.done [#allocation3], 32
    $region33: #{tpu_custom_call.1} parent=1 // pred_fallthru
      _
    // Predicated region
    $region34: #{tpu_custom_call.1} parent=1 // pred_check
      _
    $region35: #{tpu_custom_call.1} parent=1 // pred_check_branch
      %72 = sbr.rel (0) target = $region37
    $region36: #{tpu_custom_call.1} parent=1 // pred_region
      %73 = dma.done [#allocation6], 4096
    $region37: #{tpu_custom_call.1} parent=1 // pred_fallthru
      _
    // Predicated region
    $region38: #{tpu_custom_call.1} parent=1 // pred_check
      _
    $region39: #{tpu_custom_call.1} parent=1 // pred_check_branch
      %75 = sbr.rel (0) target = $region41
    $region40: #{tpu_custom_call.1} parent=1 // pred_region
      %76 = dma.done [#allocation6], 4096
    $region41: #{tpu_custom_call.1} parent=1 // pred_fallthru
      _
    // Predicated region
    $region42: #{tpu_custom_call.1} parent=1 // pred_check
      _
    $region43: #{tpu_custom_call.1} parent=1 // pred_check_branch
      %78 = sbr.rel (0) target = $region45
    $region44: #{tpu_custom_call.1} parent=1 // pred_region
      %79 = dma.done [#allocation9], 2048
    $region45: #{tpu_custom_call.1} parent=1 // pred_fallthru
      _
    %v81 = vld [vmem:[#allocation2] sm:$0x3]
    %v82 = vld [vmem:[#allocation5] sm:$0xff]
    %v83 = vld [vmem:[#allocation5 + $0x8] sm:$0xff]
    %v84 = vld [vmem:[#allocation5 + $0x10] sm:$0xff]
    %v85 = vld [vmem:[#allocation5 + $0x18] sm:$0xff]
    %v86 = vld [vmem:[#allocation5 + $0x20] sm:$0xff]
    %v87 = vld [vmem:[#allocation5 + $0x28] sm:$0xff]
    %v88 = vld [vmem:[#allocation5 + $0x30] sm:$0xff]
    %v89 = vld [vmem:[#allocation5 + $0x38] sm:$0xff]
    %v90 = vld [vmem:[#allocation5 + $0x40] sm:$0xff]
    %v91 = vld [vmem:[#allocation5 + $0x48] sm:$0xff]
    %v92 = vld [vmem:[#allocation5 + $0x50] sm:$0xff]
    %v93 = vld [vmem:[#allocation5 + $0x58] sm:$0xff]
    %v94 = vld [vmem:[#allocation5 + $0x60] sm:$0xff]
    %v95 = vld [vmem:[#allocation5 + $0x68] sm:$0xff]
    %v96 = vld [vmem:[#allocation5 + $0x70] sm:$0xff]
    %v97 = vld [vmem:[#allocation5 + $0x78] sm:$0xff]
    %v98 = vld [vmem:[#allocation5 + $0x80] sm:$0xff]
    %v99 = vld [vmem:[#allocation5 + $0x88] sm:$0xff]
    %v100 = vld [vmem:[#allocation5 + $0x90] sm:$0xff]
    %v101 = vld [vmem:[#allocation5 + $0x98] sm:$0xff]
    %v102 = vld [vmem:[#allocation5 + $0xa0] sm:$0xff]
    %v103 = vld [vmem:[#allocation5 + $0xa8] sm:$0xff]
    %v104 = vld [vmem:[#allocation5 + $0xb0] sm:$0xff]
    %v105 = vld [vmem:[#allocation5 + $0xb8] sm:$0xff]
    %v106 = vld [vmem:[#allocation5 + $0xc0] sm:$0xff]
    %v107 = vld [vmem:[#allocation5 + $0xc8] sm:$0xff]
    %v108 = vld [vmem:[#allocation5 + $0xd0] sm:$0xff]
    %v109 = vld [vmem:[#allocation5 + $0xd8] sm:$0xff]
    %v110 = vld [vmem:[#allocation5 + $0xe0] sm:$0xff]
    %v111 = vld [vmem:[#allocation5 + $0xe8] sm:$0xff]
    %v112 = vld [vmem:[#allocation5 + $0xf0] sm:$0xff]
    %v113 = vld [vmem:[#allocation5 + $0xf8] sm:$0xff]
    %v114 = vld [vmem:[%s2] sm:$0x3]
    %v117 = vunpack.c.l.s4 1966171168
    %v118 = vunpack.c.0.s8 %v117
    %v119 = vlaneseq
    %v120 = vshrl.u32 %v119, 7
    %v121 = vsub.s32 %v118, %v120
    %v122 = vrot.slane %v81, %v121
    %v123 = vcombine.high %v122, %v122
    %v125 = vunpack.c.l.s4 1966171168
    %v126 = vunpack.c.0.s8 %v125
    %v127 = vlaneseq
    %v128 = vshrl.u32 %v127, 7
    %v129 = vsub.s32 %v126, %v128
    %v130 = vrot.slane %v122, %v129
    %v132 = vunpack.c.l.s4 1966171168
    %v133 = vunpack.c.0.s8 %v132
    %v134 = vlaneseq
    %v135 = vshrl.u32 %v134, 7
    %v136 = vsub.s32 %v133, %v135
    %v137 = vrot.slane %v123, %v136
    %v172 = vunpack.c.l.b16 %v82
    %v173 = vunpack.c.h.b16 %v82
    %v174 = vunpack.c.l.b16 %v83
    %v175 = vunpack.c.h.b16 %v83
    %v176 = vunpack.c.l.b16 %v84
    %v177 = vunpack.c.h.b16 %v84
    %v178 = vunpack.c.l.b16 %v85
    %v179 = vunpack.c.h.b16 %v85
    %v180 = vunpack.c.l.b16 %v86
    %v181 = vunpack.c.h.b16 %v86
    %v182 = vunpack.c.l.b16 %v87
    %v183 = vunpack.c.h.b16 %v87
    %v184 = vunpack.c.l.b16 %v88
    %v185 = vunpack.c.h.b16 %v88
    %v186 = vunpack.c.l.b16 %v89
    %v187 = vunpack.c.h.b16 %v89
    %v188 = vunpack.c.l.b16 %v90
    %v189 = vunpack.c.h.b16 %v90
    %v190 = vunpack.c.l.b16 %v91
    %v191 = vunpack.c.h.b16 %v91
    %v192 = vunpack.c.l.b16 %v92
    %v193 = vunpack.c.h.b16 %v92
    %v194 = vunpack.c.l.b16 %v93
    %v195 = vunpack.c.h.b16 %v93
    %v196 = vunpack.c.l.b16 %v94
    %v197 = vunpack.c.h.b16 %v94
    %v198 = vunpack.c.l.b16 %v95
    %v199 = vunpack.c.h.b16 %v95
    %v200 = vunpack.c.l.b16 %v96
    %v201 = vunpack.c.h.b16 %v96
    %v202 = vunpack.c.l.b16 %v97
    %v203 = vunpack.c.h.b16 %v97
    %v204 = vunpack.c.l.b16 %v98
    %v205 = vunpack.c.h.b16 %v98
    %v206 = vunpack.c.l.b16 %v99
    %v207 = vunpack.c.h.b16 %v99
    %v208 = vunpack.c.l.b16 %v100
    %v209 = vunpack.c.h.b16 %v100
    %v210 = vunpack.c.l.b16 %v101
    %v211 = vunpack.c.h.b16 %v101
    %v212 = vunpack.c.l.b16 %v102
    %v213 = vunpack.c.h.b16 %v102
    %v214 = vunpack.c.l.b16 %v103
    %v215 = vunpack.c.h.b16 %v103
    %v216 = vunpack.c.l.b16 %v104
    %v217 = vunpack.c.h.b16 %v104
    %v218 = vunpack.c.l.b16 %v105
    %v219 = vunpack.c.h.b16 %v105
    %v220 = vunpack.c.l.b16 %v106
    %v221 = vunpack.c.h.b16 %v106
    %v222 = vunpack.c.l.b16 %v107
    %v223 = vunpack.c.h.b16 %v107
    %v224 = vunpack.c.l.b16 %v108
    %v225 = vunpack.c.h.b16 %v108
    %v226 = vunpack.c.l.b16 %v109
    %v227 = vunpack.c.h.b16 %v109
    %v228 = vunpack.c.l.b16 %v110
    %v229 = vunpack.c.h.b16 %v110
    %v230 = vunpack.c.l.b16 %v111
    %v231 = vunpack.c.h.b16 %v111
    %v232 = vunpack.c.l.b16 %v112
    %v233 = vunpack.c.h.b16 %v112
    %v234 = vunpack.c.l.b16 %v113
    %v235 = vunpack.c.h.b16 %v113
    %v236 = vpack.c.b16 %v174, %v172
    %v237 = vpack.c.b16 %v175, %v173
    %v238 = vpack.c.b16 %v178, %v176
    %v239 = vpack.c.b16 %v179, %v177
    %v240 = vpack.c.b16 %v182, %v180
    %v241 = vpack.c.b16 %v183, %v181
    %v242 = vpack.c.b16 %v186, %v184
    %v243 = vpack.c.b16 %v187, %v185
    %v244 = vpack.c.b16 %v190, %v188
    %v245 = vpack.c.b16 %v191, %v189
    %v246 = vpack.c.b16 %v194, %v192
    %v247 = vpack.c.b16 %v195, %v193
    %v248 = vpack.c.b16 %v198, %v196
    %v249 = vpack.c.b16 %v199, %v197
    %v250 = vpack.c.b16 %v202, %v200
    %v251 = vpack.c.b16 %v203, %v201
    %v252 = vpack.c.b16 %v206, %v204
    %v253 = vpack.c.b16 %v207, %v205
    %v254 = vpack.c.b16 %v210, %v208
    %v255 = vpack.c.b16 %v211, %v209
    %v256 = vpack.c.b16 %v214, %v212
    %v257 = vpack.c.b16 %v215, %v213
    %v258 = vpack.c.b16 %v218, %v216
    %v259 = vpack.c.b16 %v219, %v217
    %v260 = vpack.c.b16 %v222, %v220
    %v261 = vpack.c.b16 %v223, %v221
    %v262 = vpack.c.b16 %v226, %v224
    %v263 = vpack.c.b16 %v227, %v225
    %v264 = vpack.c.b16 %v230, %v228
    %v265 = vpack.c.b16 %v231, %v229
    %v266 = vpack.c.b16 %v234, %v232
    %v267 = vpack.c.b16 %v235, %v233
    %v301 = vlaneseq
    %v302 = vshrl.u32 %v301, 7
    %v303 = vsub.s32 0, %v302
    %v304 = vrot.slane %v114, %v303
    %v305 = vlaneseq
    %v306 = vshrl.u32 %v305, 7
    %v307 = vsub.s32 1, %v306
    %v308 = vrot.slane %v114, %v307
    %311 = vmatprep.subr.bf16.mxu0 %v237
    %312 = vmatpush1.bf16.msra.mxu0 %v236
    %313 = vmatprep.subr.bf16.mxu0 %v239
    %314 = vmatpush1.bf16.msra.mxu0 %v238
    %315 = vmatprep.subr.bf16.mxu0 %v241
    %316 = vmatpush1.bf16.msra.mxu0 %v240
    %317 = vmatprep.subr.bf16.mxu0 %v243
    %318 = vmatpush1.bf16.msra.mxu0 %v242
    %319 = vmatprep.subr.bf16.mxu0 %v245
    %320 = vmatpush1.bf16.msra.mxu0 %v244
    %321 = vmatprep.subr.bf16.mxu0 %v247
    %322 = vmatpush1.bf16.msra.mxu0 %v246
    %323 = vmatprep.subr.bf16.mxu0 %v249
    %324 = vmatpush1.bf16.msra.mxu0 %v248
    %325 = vmatprep.subr.bf16.mxu0 %v251
    %326 = vmatpush1.bf16.msra.mxu0 %v250
    %327 = vmatprep.subr.bf16.mxu0 %v253
    %328 = vmatpush1.bf16.msra.mxu0 %v252
    %329 = vmatprep.subr.bf16.mxu0 %v255
    %330 = vmatpush1.bf16.msra.mxu0 %v254
    %331 = vmatprep.subr.bf16.mxu0 %v257
    %332 = vmatpush1.bf16.msra.mxu0 %v256
    %333 = vmatprep.subr.bf16.mxu0 %v259
    %334 = vmatpush1.bf16.msra.mxu0 %v258
    %335 = vmatprep.subr.bf16.mxu0 %v261
    %336 = vmatpush1.bf16.msra.mxu0 %v260
    %337 = vmatprep.subr.bf16.mxu0 %v263
    %338 = vmatpush1.bf16.msra.mxu0 %v262
    %339 = vmatprep.subr.bf16.mxu0 %v265
    %340 = vmatpush1.bf16.msra.mxu0 %v264
    %341 = vmatprep.subr.bf16.mxu0 %v267
    %342 = vmatpush1.bf16.msra.mxu0 %v266
    %343 = vmatprep.mubr.bf16.mxu0 %v137
    %344 = vmatmul.mubr.bf16.gmra.mrb[0].mxu0 %v130
    %v345 = vpop.f32.mrb[0].mxu0
    %v346 = vadd.f32 %v304, %v345
    %v347 = vpop.f32.mrb[0].mxu0
    %v348 = vadd.f32 %v308, %v347
    %v349 = vpop.f32.mrb[0].mxu0
    %v350 = vpop.f32.mrb[0].mxu0
    %351 = vdwg.mxu0
    %v352 = vtanh.pop %v346
    %v353 = vtanh.pop %v348
    %v354 = vpack.c.bf16 %v352, %v352
    %v355 = vpack.c.bf16 %v353, %v353
    %v356 = vld [vmem:[#allocation7] sm:$0xff]
    %v357 = vld [vmem:[#allocation7 + $0x8] sm:$0xff]
    %v358 = vld [vmem:[#allocation7 + $0x10] sm:$0xff]
    %v359 = vld [vmem:[#allocation7 + $0x18] sm:$0xff]
    %v360 = vld [vmem:[#allocation7 + $0x20] sm:$0xff]
    %v361 = vld [vmem:[#allocation7 + $0x28] sm:$0xff]
    %v362 = vld [vmem:[#allocation7 + $0x30] sm:$0xff]
    %v363 = vld [vmem:[#allocation7 + $0x38] sm:$0xff]
    %v364 = vld [vmem:[#allocation7 + $0x40] sm:$0xff]
    %v365 = vld [vmem:[#allocation7 + $0x48] sm:$0xff]
    %v366 = vld [vmem:[#allocation7 + $0x50] sm:$0xff]
    %v367 = vld [vmem:[#allocation7 + $0x58] sm:$0xff]
    %v368 = vld [vmem:[#allocation7 + $0x60] sm:$0xff]
    %v369 = vld [vmem:[#allocation7 + $0x68] sm:$0xff]
    %v370 = vld [vmem:[#allocation7 + $0x70] sm:$0xff]
    %v371 = vld [vmem:[#allocation7 + $0x78] sm:$0xff]
    %v372 = vld [vmem:[#allocation7 + $0x80] sm:$0xff]
    %v373 = vld [vmem:[#allocation7 + $0x88] sm:$0xff]
    %v374 = vld [vmem:[#allocation7 + $0x90] sm:$0xff]
    %v375 = vld [vmem:[#allocation7 + $0x98] sm:$0xff]
    %v376 = vld [vmem:[#allocation7 + $0xa0] sm:$0xff]
    %v377 = vld [vmem:[#allocation7 + $0xa8] sm:$0xff]
    %v378 = vld [vmem:[#allocation7 + $0xb0] sm:$0xff]
    %v379 = vld [vmem:[#allocation7 + $0xb8] sm:$0xff]
    %v380 = vld [vmem:[#allocation7 + $0xc0] sm:$0xff]
    %v381 = vld [vmem:[#allocation7 + $0xc8] sm:$0xff]
    %v382 = vld [vmem:[#allocation7 + $0xd0] sm:$0xff]
    %v383 = vld [vmem:[#allocation7 + $0xd8] sm:$0xff]
    %v384 = vld [vmem:[#allocation7 + $0xe0] sm:$0xff]
    %v385 = vld [vmem:[#allocation7 + $0xe8] sm:$0xff]
    %v386 = vld [vmem:[#allocation7 + $0xf0] sm:$0xff]
    %v387 = vld [vmem:[#allocation7 + $0xf8] sm:$0xff]
    %v388 = vld [vmem:[%s4] sm:$0x3]
    %v421 = vunpack.c.l.b16 %v356
    %v422 = vunpack.c.h.b16 %v356
    %v423 = vunpack.c.l.b16 %v357
    %v424 = vunpack.c.h.b16 %v357
    %v425 = vunpack.c.l.b16 %v358
    %v426 = vunpack.c.h.b16 %v358
    %v427 = vunpack.c.l.b16 %v359
    %v428 = vunpack.c.h.b16 %v359
    %v429 = vunpack.c.l.b16 %v360
    %v430 = vunpack.c.h.b16 %v360
    %v431 = vunpack.c.l.b16 %v361
    %v432 = vunpack.c.h.b16 %v361
    %v433 = vunpack.c.l.b16 %v362
    %v434 = vunpack.c.h.b16 %v362
    %v435 = vunpack.c.l.b16 %v363
    %v436 = vunpack.c.h.b16 %v363
    %v437 = vunpack.c.l.b16 %v364
    %v438 = vunpack.c.h.b16 %v364
    %v439 = vunpack.c.l.b16 %v365
    %v440 = vunpack.c.h.b16 %v365
    %v441 = vunpack.c.l.b16 %v366
    %v442 = vunpack.c.h.b16 %v366
    %v443 = vunpack.c.l.b16 %v367
    %v444 = vunpack.c.h.b16 %v367
    %v445 = vunpack.c.l.b16 %v368
    %v446 = vunpack.c.h.b16 %v368
    %v447 = vunpack.c.l.b16 %v369
    %v448 = vunpack.c.h.b16 %v369
    %v449 = vunpack.c.l.b16 %v370
    %v450 = vunpack.c.h.b16 %v370
    %v451 = vunpack.c.l.b16 %v371
    %v452 = vunpack.c.h.b16 %v371
    %v453 = vunpack.c.l.b16 %v372
    %v454 = vunpack.c.h.b16 %v372
    %v455 = vunpack.c.l.b16 %v373
    %v456 = vunpack.c.h.b16 %v373
    %v457 = vunpack.c.l.b16 %v374
    %v458 = vunpack.c.h.b16 %v374
    %v459 = vunpack.c.l.b16 %v375
    %v460 = vunpack.c.h.b16 %v375
    %v461 = vunpack.c.l.b16 %v376
    %v462 = vunpack.c.h.b16 %v376
    %v463 = vunpack.c.l.b16 %v377
    %v464 = vunpack.c.h.b16 %v377
    %v465 = vunpack.c.l.b16 %v378
    %v466 = vunpack.c.h.b16 %v378
    %v467 = vunpack.c.l.b16 %v379
    %v468 = vunpack.c.h.b16 %v379
    %v469 = vunpack.c.l.b16 %v380
    %v470 = vunpack.c.h.b16 %v380
    %v471 = vunpack.c.l.b16 %v381
    %v472 = vunpack.c.h.b16 %v381
    %v473 = vunpack.c.l.b16 %v382
    %v474 = vunpack.c.h.b16 %v382
    %v475 = vunpack.c.l.b16 %v383
    %v476 = vunpack.c.h.b16 %v383
    %v477 = vunpack.c.l.b16 %v384
    %v478 = vunpack.c.h.b16 %v384
    %v479 = vunpack.c.l.b16 %v385
    %v480 = vunpack.c.h.b16 %v385
    %v481 = vunpack.c.l.b16 %v386
    %v482 = vunpack.c.h.b16 %v386
    %v483 = vunpack.c.l.b16 %v387
    %v484 = vunpack.c.h.b16 %v387
    %v485 = vpack.c.b16 %v423, %v421
    %v486 = vpack.c.b16 %v424, %v422
    %v487 = vpack.c.b16 %v427, %v425
    %v488 = vpack.c.b16 %v428, %v426
    %v489 = vpack.c.b16 %v431, %v429
    %v490 = vpack.c.b16 %v432, %v430
    %v491 = vpack.c.b16 %v435, %v433
    %v492 = vpack.c.b16 %v436, %v434
    %v493 = vpack.c.b16 %v439, %v437
    %v494 = vpack.c.b16 %v440, %v438
    %v495 = vpack.c.b16 %v443, %v441
    %v496 = vpack.c.b16 %v444, %v442
    %v497 = vpack.c.b16 %v447, %v445
    %v498 = vpack.c.b16 %v448, %v446
    %v499 = vpack.c.b16 %v451, %v449
    %v500 = vpack.c.b16 %v452, %v450
    %v501 = vpack.c.b16 %v455, %v453
    %v502 = vpack.c.b16 %v456, %v454
    %v503 = vpack.c.b16 %v459, %v457
    %v504 = vpack.c.b16 %v460, %v458
    %v505 = vpack.c.b16 %v463, %v461
    %v506 = vpack.c.b16 %v464, %v462
    %v507 = vpack.c.b16 %v467, %v465
    %v508 = vpack.c.b16 %v468, %v466
    %v509 = vpack.c.b16 %v471, %v469
    %v510 = vpack.c.b16 %v472, %v470
    %v511 = vpack.c.b16 %v475, %v473
    %v512 = vpack.c.b16 %v476, %v474
    %v513 = vpack.c.b16 %v479, %v477
    %v514 = vpack.c.b16 %v480, %v478
    %v515 = vpack.c.b16 %v483, %v481
    %v516 = vpack.c.b16 %v484, %v482
    %v550 = vlaneseq
    %v551 = vshrl.u32 %v550, 7
    %v552 = vsub.s32 0, %v551
    %v553 = vrot.slane %v388, %v552
    %v554 = vlaneseq
    %v555 = vshrl.u32 %v554, 7
    %v556 = vsub.s32 1, %v555
    %v557 = vrot.slane %v388, %v556
    %560 = vmatprep.subr.bf16.mxu0 %v486
    %561 = vmatpush1.bf16.msra.mxu0 %v485
    %562 = vmatprep.subr.bf16.mxu0 %v488
    %563 = vmatpush1.bf16.msra.mxu0 %v487
    %564 = vmatprep.subr.bf16.mxu0 %v490
    %565 = vmatpush1.bf16.msra.mxu0 %v489
    %566 = vmatprep.subr.bf16.mxu0 %v492
    %567 = vmatpush1.bf16.msra.mxu0 %v491
    %568 = vmatprep.subr.bf16.mxu0 %v494
    %569 = vmatpush1.bf16.msra.mxu0 %v493
    %570 = vmatprep.subr.bf16.mxu0 %v496
    %571 = vmatpush1.bf16.msra.mxu0 %v495
    %572 = vmatprep.subr.bf16.mxu0 %v498
    %573 = vmatpush1.bf16.msra.mxu0 %v497
    %574 = vmatprep.subr.bf16.mxu0 %v500
    %575 = vmatpush1.bf16.msra.mxu0 %v499
    %576 = vmatprep.subr.bf16.mxu0 %v502
    %577 = vmatpush1.bf16.msra.mxu0 %v501
    %578 = vmatprep.subr.bf16.mxu0 %v504
    %579 = vmatpush1.bf16.msra.mxu0 %v503
    %580 = vmatprep.subr.bf16.mxu0 %v506
    %581 = vmatpush1.bf16.msra.mxu0 %v505
    %582 = vmatprep.subr.bf16.mxu0 %v508
    %583 = vmatpush1.bf16.msra.mxu0 %v507
    %584 = vmatprep.subr.bf16.mxu0 %v510
    %585 = vmatpush1.bf16.msra.mxu0 %v509
    %586 = vmatprep.subr.bf16.mxu0 %v512
    %587 = vmatpush1.bf16.msra.mxu0 %v511
    %588 = vmatprep.subr.bf16.mxu0 %v514
    %589 = vmatpush1.bf16.msra.mxu0 %v513
    %590 = vmatprep.subr.bf16.mxu0 %v516
    %591 = vmatpush1.bf16.msra.mxu0 %v515
    %592 = vmatprep.mubr.bf16.mxu0 %v355
    %593 = vmatmul.mubr.bf16.gmra.mrb[0].mxu0 %v354
    %v594 = vpop.f32.mrb[0].mxu0
    %v595 = vadd.f32 %v553, %v594
    %v596 = vpop.f32.mrb[0].mxu0
    %v597 = vadd.f32 %v557, %v596
    %v598 = vpop.f32.mrb[0].mxu0
    %v599 = vpop.f32.mrb[0].mxu0
    %600 = vdwg.mxu0
    %v601 = vtanh.pop %v595
    %v602 = vtanh.pop %v597
    %v603 = vpack.c.bf16 %v601, %v601
    %v604 = vpack.c.bf16 %v602, %v602
    %v605 = vld [vmem:[#allocation8] sm:$0xf]
    %v606 = vld [vmem:[#allocation8 + $0x4] sm:$0xf]
    %v607 = vld [vmem:[#allocation8 + $0x8] sm:$0xf]
    %v608 = vld [vmem:[#allocation8 + $0xc] sm:$0xf]
    %v609 = vld [vmem:[#allocation8 + $0x10] sm:$0xf]
    %v610 = vld [vmem:[#allocation8 + $0x14] sm:$0xf]
    %v611 = vld [vmem:[#allocation8 + $0x18] sm:$0xf]
    %v612 = vld [vmem:[#allocation8 + $0x1c] sm:$0xf]
    %v613 = vld [vmem:[#allocation8 + $0x20] sm:$0xf]
    %v614 = vld [vmem:[#allocation8 + $0x24] sm:$0xf]
    %v615 = vld [vmem:[#allocation8 + $0x28] sm:$0xf]
    %v616 = vld [vmem:[#allocation8 + $0x2c] sm:$0xf]
    %v617 = vld [vmem:[#allocation8 + $0x30] sm:$0xf]
    %v618 = vld [vmem:[#allocation8 + $0x34] sm:$0xf]
    %v619 = vld [vmem:[#allocation8 + $0x38] sm:$0xf]
    %v620 = vld [vmem:[#allocation8 + $0x3c] sm:$0xf]
    %v621 = vld [vmem:[#allocation8 + $0x40] sm:$0xf]
    %v622 = vld [vmem:[#allocation8 + $0x44] sm:$0xf]
    %v623 = vld [vmem:[#allocation8 + $0x48] sm:$0xf]
    %v624 = vld [vmem:[#allocation8 + $0x4c] sm:$0xf]
    %v625 = vld [vmem:[#allocation8 + $0x50] sm:$0xf]
    %v626 = vld [vmem:[#allocation8 + $0x54] sm:$0xf]
    %v627 = vld [vmem:[#allocation8 + $0x58] sm:$0xf]
    %v628 = vld [vmem:[#allocation8 + $0x5c] sm:$0xf]
    %v629 = vld [vmem:[#allocation8 + $0x60] sm:$0xf]
    %v630 = vld [vmem:[#allocation8 + $0x64] sm:$0xf]
    %v631 = vld [vmem:[#allocation8 + $0x68] sm:$0xf]
    %v632 = vld [vmem:[#allocation8 + $0x6c] sm:$0xf]
    %v633 = vld [vmem:[#allocation8 + $0x70] sm:$0xf]
    %v634 = vld [vmem:[#allocation8 + $0x74] sm:$0xf]
    %v635 = vld [vmem:[#allocation8 + $0x78] sm:$0xf]
    %v636 = vld [vmem:[#allocation8 + $0x7c] sm:$0xf]
    %v637 = vld [vmem:[%s6] sm:$0x1]
    %v670 = vunpack.c.l.b16 %v605
    %v671 = vunpack.c.l.b16 %v606
    %v672 = vunpack.c.l.b16 %v607
    %v673 = vunpack.c.l.b16 %v608
    %v674 = vunpack.c.l.b16 %v609
    %v675 = vunpack.c.l.b16 %v610
    %v676 = vunpack.c.l.b16 %v611
    %v677 = vunpack.c.l.b16 %v612
    %v678 = vunpack.c.l.b16 %v613
    %v679 = vunpack.c.l.b16 %v614
    %v680 = vunpack.c.l.b16 %v615
    %v681 = vunpack.c.l.b16 %v616
    %v682 = vunpack.c.l.b16 %v617
    %v683 = vunpack.c.l.b16 %v618
    %v684 = vunpack.c.l.b16 %v619
    %v685 = vunpack.c.l.b16 %v620
    %v686 = vunpack.c.l.b16 %v621
    %v687 = vunpack.c.l.b16 %v622
    %v688 = vunpack.c.l.b16 %v623
    %v689 = vunpack.c.l.b16 %v624
    %v690 = vunpack.c.l.b16 %v625
    %v691 = vunpack.c.l.b16 %v626
    %v692 = vunpack.c.l.b16 %v627
    %v693 = vunpack.c.l.b16 %v628
    %v694 = vunpack.c.l.b16 %v629
    %v695 = vunpack.c.l.b16 %v630
    %v696 = vunpack.c.l.b16 %v631
    %v697 = vunpack.c.l.b16 %v632
    %v698 = vunpack.c.l.b16 %v633
    %v699 = vunpack.c.l.b16 %v634
    %v700 = vunpack.c.l.b16 %v635
    %v701 = vunpack.c.l.b16 %v636
    %v702 = vpack.c.b16 %v671, %v670
    %v703 = vpack.c.b16 %v673, %v672
    %v704 = vpack.c.b16 %v675, %v674
    %v705 = vpack.c.b16 %v677, %v676
    %v706 = vpack.c.b16 %v679, %v678
    %v707 = vpack.c.b16 %v681, %v680
    %v708 = vpack.c.b16 %v683, %v682
    %v709 = vpack.c.b16 %v685, %v684
    %v710 = vpack.c.b16 %v687, %v686
    %v711 = vpack.c.b16 %v689, %v688
    %v712 = vpack.c.b16 %v691, %v690
    %v713 = vpack.c.b16 %v693, %v692
    %v714 = vpack.c.b16 %v695, %v694
    %v715 = vpack.c.b16 %v697, %v696
    %v716 = vpack.c.b16 %v699, %v698
    %v717 = vpack.c.b16 %v701, %v700
    %734 = vmatprep.subr.bf16.mxu0 0
    %735 = vmatpush1.bf16.msra.mxu0 %v702
    %736 = vmatprep.subr.bf16.mxu0 0
    %737 = vmatpush1.bf16.msra.mxu0 %v703
    %738 = vmatprep.subr.bf16.mxu0 0
    %739 = vmatpush1.bf16.msra.mxu0 %v704
    %740 = vmatprep.subr.bf16.mxu0 0
    %741 = vmatpush1.bf16.msra.mxu0 %v705
    %742 = vmatprep.subr.bf16.mxu0 0
    %743 = vmatpush1.bf16.msra.mxu0 %v706
    %744 = vmatprep.subr.bf16.mxu0 0
    %745 = vmatpush1.bf16.msra.mxu0 %v707
    %746 = vmatprep.subr.bf16.mxu0 0
    %747 = vmatpush1.bf16.msra.mxu0 %v708
    %748 = vmatprep.subr.bf16.mxu0 0
    %749 = vmatpush1.bf16.msra.mxu0 %v709
    %750 = vmatprep.subr.bf16.mxu0 0
    %751 = vmatpush1.bf16.msra.mxu0 %v710
    %752 = vmatprep.subr.bf16.mxu0 0
    %753 = vmatpush1.bf16.msra.mxu0 %v711
    %754 = vmatprep.subr.bf16.mxu0 0
    %755 = vmatpush1.bf16.msra.mxu0 %v712
    %756 = vmatprep.subr.bf16.mxu0 0
    %757 = vmatpush1.bf16.msra.mxu0 %v713
    %758 = vmatprep.subr.bf16.mxu0 0
    %759 = vmatpush1.bf16.msra.mxu0 %v714
    %760 = vmatprep.subr.bf16.mxu0 0
    %761 = vmatpush1.bf16.msra.mxu0 %v715
    %762 = vmatprep.subr.bf16.mxu0 0
    %763 = vmatpush1.bf16.msra.mxu0 %v716
    %764 = vmatprep.subr.bf16.mxu0 0
    %765 = vmatpush1.bf16.msra.mxu0 %v717
    %766 = vmatprep.mubr.bf16.mxu0 %v604
    %767 = vmatmul.mubr.bf16.gmra.mrb[0].mxu0 %v603
    %v768 = vpop.f32.mrb[0].mxu0
    %v769 = vadd.f32 %v637, %v768
    %v770 = vpop.f32.mrb[0].mxu0
    %v771 = vpop.f32.mrb[0].mxu0
    %v772 = vpop.f32.mrb[0].mxu0
    %773 = vdwg.mxu0
    %v774 = vxor.u32 %v769, 2147483648
    %v775 = vmul.f32 %v774, 1.442695
    %v776 = vpow.pop %v775
    %v777 = vadd.f32 %v776, 1.0
    %v778 = vrcp.pop %v777
    %v779 = vmul.f32 1.0, %v778
    %780 = vst [vmem:[#allocation10] sm:$0x1] %v779
    // Predicated region
    $region46: #{tpu_custom_call.1} parent=1 // pred_check
      _
    $region47: #{tpu_custom_call.1} parent=1 // pred_check_branch
      %782 = sbr.rel (0) target = $region49
    $region48: #{tpu_custom_call.1} parent=1 // pred_region
      %s784 = ssub.s32 16, 16
      %785 = vsyncadd [#allocation4], %s784
      %s787 = sshll.u32 [#allocation10], 4
      %s788 = int_to_ptr.vmem [resolvable:$true] %s787
      %790 = dma.vmem_to_hbm [thread:$0]  %s788, 16, %s7, [#allocation4]
    $region49: #{tpu_custom_call.1} parent=1 // pred_fallthru
      _
    // Predicated region
    $region50: #{tpu_custom_call.1} parent=1 // pred_check
      _
    $region51: #{tpu_custom_call.1} parent=1 // pred_check_branch
      %792 = sbr.rel (0) target = $region53
    $region52: #{tpu_custom_call.1} parent=1 // pred_region
      %793 = dma.done [#allocation4], 16
    $region53: #{tpu_custom_call.1} parent=1 // pred_fallthru
      _
    %794 = vsyncpa [#allocation3], 1
    %795 = vsyncpa [#allocation6], 1
    %796 = vsyncpa [#allocation9], 1
    %797 = vsyncpa [#allocation4], 1

</llo_original>
